<compile_context>
chip_gen: v6e
topology: v6e:2x2x1
jax: 0.10.0
libtpu: 0.0.40
codegen_flags: <defaults>
</compile_context>

<pallas_src>
import jax
import jax.numpy as jnp
from jax.experimental import pallas as pl
from jax.experimental.pallas import tpu as pltpu

_LANE = 128
_SUBLANE = 8


def _round_up(n: int, m: int) -> int:
    return ((n + m - 1) // m) * m


def _cdiv(a: int, b: int) -> int:
    return (a + b - 1) // b


def _detect_tpu():
    """Best-effort chip query -> (vmem_capacity_bytes, default_batch_tile_rows)."""
    cap, tile = 64 << 20, 256          # conservative defaults (v7x-like)
    try:
        info = pltpu.get_tpu_info()
        cap = int(getattr(info, "vmem_capacity_bytes", cap) or cap)
        if "v5" in str(info).lower():  # v5e: 4x128x128 MXU -> 128 LHS rows already fill it
            tile = 128
    except Exception:
        pass
    return cap, tile


def _layernorm_padded(x, g, b, n_true: int, eps: float = 1e-5):
    """nn.LayerNorm over the last dim when only the first `n_true` lanes are real.

    Relies on the zero-padding invariant: padded lanes of x are exactly 0 and padded
    lanes of g/b are 0, so all-lane sums equal true-lane sums and the output's padded
    lanes stay exactly 0 (keeps the invariant through the residual chain).
    """
    inv_n = 1.0 / float(n_true)
    mu = jnp.sum(x, axis=-1, keepdims=True) * inv_n
    ex2 = jnp.sum(x * x, axis=-1, keepdims=True) * inv_n
    var = ex2 - mu * mu                                   # biased variance, like torch
    return (x - mu) * jax.lax.rsqrt(var + eps) * g + b


def _layernorm(x, g, b, eps=1e-5):
    """Plain LayerNorm (pure-JAX reference path)."""
    mu = jnp.mean(x, axis=-1, keepdims=True)
    var = jnp.mean((x - mu) ** 2, axis=-1, keepdims=True)
    return (x - mu) * jax.lax.rsqrt(var + eps) * g + b


def _make_kernel(layer_norm: bool, width_true: int, matmul_dtype, weights_resident: bool):
    def mm(a, w):
        # Activations cast to the MXU dtype (bf16 by default); weights already are.
        return jnp.dot(a.astype(matmul_dtype), w, preferred_element_type=jnp.float32)

    def kernel(x_ref, w_in_ref, b_in_ref, w_blk_ref, p_blk_ref,
               g_post_ref, be_post_ref, w_out_ref, b_out_ref,
               o_ref, h_ref):
        d = pl.program_id(1)

        # --- input linear (once per batch tile, at the first depth step) -----------
        @pl.when(d == 0)
        def _init():
            h_ref[...] = mm(x_ref[...], w_in_ref[...]) + b_in_ref[...]

        # --- residual block d:  h += Linear_d(relu(LN_d(h))) -----------------------
        if weights_resident:
            w_d = w_blk_ref[d]        # (W_p, W_p) dynamic slice from the resident stack
        else:
            w_d = w_blk_ref[...]      # streamed per depth step
        p_d = p_blk_ref[...]          # (3, W_p): [bias; gamma; beta] for block d
        b_d = p_d[0:1, :]

        h = h_ref[...]
        if layer_norm:
            z = _layernorm_padded(h, p_d[1:2, :], p_d[2:3, :], width_true)
        else:
            z = h
        h_ref[...] = h + mm(jnp.maximum(z, 0.0), w_d) + b_d

        # --- post-LN + relu + output linear (at the last depth step) ---------------
        @pl.when(d == pl.num_programs(1) - 1)
        def _final():
            hf = h_ref[...]
            if layer_norm:
                hf = _layernorm_padded(hf, g_post_ref[...], be_post_ref[...], width_true)
            o_ref[...] = (mm(jnp.maximum(hf, 0.0), w_out_ref[...])
                          + b_out_ref[...]).astype(o_ref.dtype)

    return kernel


def residual_mlp_pallas(x, params, *, depth: int, layer_norm: bool,
                        tile_b: int | None = None, matmul_dtype=jnp.bfloat16,
                        weights_resident: bool | None = None):
    """Pallas forward of ResidualMLP.

    tile_b:           max batch-rows tile (default: chip-dependent, 128 on v5e else 256).
    matmul_dtype:     MXU input dtype; weights are stored in HBM in this dtype.
    weights_resident: force / forbid keeping all block weights resident in VMEM
                      (default: decided from the detected VMEM capacity).
    """
    # TODO(synk): depth == 0 (no residual blocks) needs a degenerate grid; not supported.
    assert depth >= 1, "depth must be >= 1"
    B, D_in = x.shape
    W = params["w_in"].shape[1]
    D_out = params["w_out"].shape[1]

    vmem_cap, tile_default = _detect_tpu()
    vmem_cap_limit = max(int(vmem_cap * 0.8), 16 << 20)   # ~51 MiB v7x, ~102 MiB v5e/v6e
    if tile_b is None:
        tile_b = tile_default

    # --- pad feature dims to 128 lanes; pick batch tile minimizing padding ----------
    D_in_p = _round_up(D_in, _LANE)
    W_p = _round_up(W, _LANE)
    D_out_p = _round_up(D_out, _LANE)

    n_bt = max(1, _cdiv(B, tile_b))                 # number of batch tiles
    tile_b = _round_up(_cdiv(B, n_bt), _SUBLANE)    # e.g. B=300, max 256 -> 2 x 152 rows
    B_p = n_bt * tile_b

    f32 = jnp.float32
    wdt = matmul_dtype

    def pad2(a, r, c, dt=f32):
        return jnp.pad(a.astype(dt), ((0, r - a.shape[0]), (0, c - a.shape[1])))

    def pad3(a, r, c, dt=f32):
        return jnp.pad(a.astype(dt), ((0, 0), (0, r - a.shape[1]), (0, c - a.shape[2])))

    x_p = pad2(x, B_p, D_in_p)
    w_in = pad2(params["w_in"], D_in_p, W_p, wdt)           # weights live in HBM as bf16
    b_in = pad2(params["b_in"], 1, W_p)
    w_blk = pad3(params["w_blk"], W_p, W_p, wdt)
    # pack per-depth bias/gamma/beta into one (depth, 3, W_p) slab -> one DMA per step
    p_blk = jnp.concatenate([pad3(params["b_blk"], 1, W_p),
                             pad3(params["g_blk"], 1, W_p),
                             pad3(params["be_blk"], 1, W_p)], axis=1)
    g_post = pad2(params["g_post"], 1, W_p)
    be_post = pad2(params["be_post"], 1, W_p)
    w_out = pad2(params["w_out"], W_p, D_out_p, wdt)
    b_out = pad2(params["b_out"], 1, D_out_p)

    # --- VMEM budget & weight-residency decision -------------------------------------
    bpe = 4
    wb = jnp.dtype(wdt).itemsize
    const_bytes = (D_in_p * W_p + W_p * D_out_p) * wb + (3 * W_p + D_out_p) * bpe
    io_bytes = 2 * tile_b * (D_in_p + D_out_p) * bpe        # x / o tiles, double-buffered
    h_bytes = tile_b * W_p * bpe                            # resident hidden-state scratch

    def budget(resident: bool) -> int:
        # Conservative: assume every pipeline-managed block is double-buffered
        # (constant-index inputs included), so the computed limit is an upper bound.
        w_term = 2 * (depth if resident else 1) * W_p * W_p * wb
        p_term = 2 * 3 * W_p * bpe
        return io_bytes + 2 * const_bytes + w_term + p_term + h_bytes

    if weights_resident is None:
        weights_resident = budget(True) + (4 << 20) <= vmem_cap_limit
    vmem_limit = int(min(max(budget(weights_resident) + (4 << 20), 16 << 20),
                         vmem_cap_limit))

    # --- BlockSpecs -------------------------------------------------------------------
    def const_spec(shape):
        zeros = (0,) * len(shape)
        return pl.BlockSpec(shape, lambda i, d: zeros)      # fetched once, stays resident

    if weights_resident:
        w_blk_spec = const_spec((depth, W_p, W_p))           # whole stack resident in VMEM
    else:
        w_blk_spec = pl.BlockSpec((None, W_p, W_p), lambda i, d: (d, 0, 0))
    p_blk_spec = pl.BlockSpec((None, 3, W_p), lambda i, d: (d, 0, 0))  # tiny per-step slab

    in_specs = [
        pl.BlockSpec((tile_b, D_in_p), lambda i, d: (i, 0)),  # x tile (same across d)
        const_spec((D_in_p, W_p)),                            # w_in
        const_spec((1, W_p)),                                 # b_in
        w_blk_spec,                                           # w_blk (resident or streamed)
        p_blk_spec,                                           # packed [b; gamma; beta]
        const_spec((1, W_p)),                                 # g_post
        const_spec((1, W_p)),                                 # be_post
        const_spec((W_p, D_out_p)),                           # w_out
        const_spec((1, D_out_p)),                             # b_out
    ]
    out_spec = pl.BlockSpec((tile_b, D_out_p), lambda i, d: (i, 0))  # written at d == last

    # --- advisory cost estimate (weight traffic depends on residency) ------------------
    flops = 2 * B_p * (D_in_p * W_p + depth * W_p * W_p + W_p * D_out_p)
    w_fetches = depth if weights_resident else n_bt * depth
    bytes_accessed = int(bpe * B_p * (D_in_p + D_out_p)
                         + w_fetches * W_p * W_p * wb
                         + n_bt * depth * 3 * W_p * bpe
                         + const_bytes)
    transcendentals = B_p * (depth + 1) if layer_norm else 0
    cost = pl.CostEstimate(flops=flops, transcendentals=transcendentals,
                           bytes_accessed=bytes_accessed)

    out = pl.pallas_call(
        _make_kernel(layer_norm, W, wdt, weights_resident),
        out_shape=jax.ShapeDtypeStruct((B_p, D_out_p), jnp.float32),
        grid=(n_bt, depth),
        in_specs=in_specs,
        out_specs=out_spec,
        scratch_shapes=[pltpu.VMEM((tile_b, W_p), jnp.float32)],   # resident hidden state
        compiler_params=pltpu.CompilerParams(
            dimension_semantics=("parallel", "arbitrary"),
            vmem_limit_bytes=vmem_limit),
        cost_estimate=cost,
    )(x_p, w_in, b_in, w_blk, p_blk, g_post, be_post, w_out, b_out)

    return out[:B, :D_out]


def residual_mlp_ref(x, params, *, depth: int, layer_norm: bool):
    """Pure-JAX reference (mirrors the PyTorch forward)."""
    h = x @ params["w_in"] + params["b_in"]
    for d in range(depth):
        z = _layernorm(h, params["g_blk"][d], params["be_blk"][d]) if layer_norm else h
        h = h + jnp.maximum(z, 0.0) @ params["w_blk"][d] + params["b_blk"][d]
    if layer_norm:
        h = _layernorm(h, params["g_post"], params["be_post"])
    return jnp.maximum(h, 0.0) @ params["w_out"] + params["b_out"]


def init_params(key, input_dim, width, depth, output_dim):
    """Deterministic synthetic init (shapes match the PyTorch module's params)."""
    ks = jax.random.split(key, 6)
    scale = 0.1
    return {
        "w_in": scale * jax.random.normal(ks[0], (input_dim, width), jnp.float32),
        "b_in": scale * jax.random.normal(ks[1], (1, width), jnp.float32),
        "w_blk": scale * jax.random.normal(ks[2], (depth, width, width), jnp.float32),
        "b_blk": scale * jax.random.normal(ks[3], (depth, 1, width), jnp.float32),
        # LayerNorm affine params (gamma=1, beta=0 init, like nn.LayerNorm)
        "g_blk": jnp.ones((depth, 1, width), jnp.float32),
        "be_blk": jnp.zeros((depth, 1, width), jnp.float32),
        "g_post": jnp.ones((1, width), jnp.float32),
        "be_post": jnp.zeros((1, width), jnp.float32),
        "w_out": scale * jax.random.normal(ks[4], (width, output_dim), jnp.float32),
        "b_out": scale * jax.random.normal(ks[5], (1, output_dim), jnp.float32),
    }


if __name__ == "__main__":
    # Small shapes consistent with the module's forward: x is (batch, input_dim).
    batch, input_dim, width, depth, output_dim = 16, 16, 32, 2, 8

    key = jax.random.PRNGKey(0)
    kx, kp = jax.random.split(key)
    x = jax.random.normal(kx, (batch, input_dim), jnp.float32)
    params = init_params(kp, input_dim, width, depth, output_dim)

    ok = True
    for layer_norm in (True, False):       # exercise both LN and Identity paths
        y_ref = residual_mlp_ref(x, params, depth=depth, layer_norm=layer_norm)

        # Production path: bf16 MXU weights, resident weight stack (fits easily here).
        y = jax.block_until_ready(
            residual_mlp_pallas(x, params, depth=depth, layer_norm=layer_norm))
        assert y.shape == (batch, output_dim)
        ok = ok and bool(jnp.allclose(y, y_ref, atol=3e-2, rtol=3e-2))

        # Exact-math check: f32 MXU path, force the streaming (per-depth DMA) code path.
        y32 = jax.block_until_ready(
            residual_mlp_pallas(x, params, depth=depth, layer_norm=layer_norm,
                                matmul_dtype=jnp.float32, weights_resident=False))
        assert y32.shape == (batch, output_dim)
        ok = ok and bool(jnp.allclose(y32, y_ref, atol=1e-4, rtol=1e-4))

    assert ok, "mismatch vs reference"
    print("KERNEL_OK")
</pallas_src>

<mosaic_0001>
module attributes {stable_mosaic.version = 11 : i64} {
  func.func @kernel(%arg0: i32, %arg1: i32, %arg2: memref<16x128xf32, #tpu.memory_space<vmem>>, %arg3: memref<128x128xbf16, #tpu.memory_space<vmem>>, %arg4: memref<1x128xf32, #tpu.memory_space<vmem>>, %arg5: memref<2x128x128xbf16, #tpu.memory_space<vmem>>, %arg6: memref<1x3x128xf32, #tpu.memory_space<vmem>>, %arg7: memref<1x128xf32, #tpu.memory_space<vmem>>, %arg8: memref<1x128xf32, #tpu.memory_space<vmem>>, %arg9: memref<128x128xbf16, #tpu.memory_space<vmem>>, %arg10: memref<1x128xf32, #tpu.memory_space<vmem>>, %arg11: memref<16x128xf32, #tpu.memory_space<vmem>>, %arg12: memref<16x128xf32, #tpu.memory_space<vmem>>) attributes {dimension_semantics = [#tpu.dimension_semantics<parallel>, #tpu.dimension_semantics<arbitrary>], iteration_bounds = array<i64: 1, 2>, scalar_prefetch = 0 : i64, scratch_operands = 1 : i64, tpu.core_type = #tpu.core_type<tc>, window_params = [{transform_indices = @transform_0, window_bounds = array<i64: 16, 128>}, {pipeline_mode = #tpu.pipeline_mode<synchronous>, transform_indices = @transform_1, window_bounds = array<i64: 128, 128>}, {pipeline_mode = #tpu.pipeline_mode<synchronous>, transform_indices = @transform_2, window_bounds = array<i64: 1, 128>}, {pipeline_mode = #tpu.pipeline_mode<synchronous>, transform_indices = @transform_3, window_bounds = array<i64: 2, 128, 128>}, {transform_indices = @transform_4, window_bounds = array<i64: 1, 3, 128>}, {pipeline_mode = #tpu.pipeline_mode<synchronous>, transform_indices = @transform_5, window_bounds = array<i64: 1, 128>}, {pipeline_mode = #tpu.pipeline_mode<synchronous>, transform_indices = @transform_6, window_bounds = array<i64: 1, 128>}, {pipeline_mode = #tpu.pipeline_mode<synchronous>, transform_indices = @transform_7, window_bounds = array<i64: 128, 128>}, {pipeline_mode = #tpu.pipeline_mode<synchronous>, transform_indices = @transform_8, window_bounds = array<i64: 1, 128>}, {transform_indices = @transform_9, window_bounds = array<i64: 16, 128>}]} {
    %c0_i32 = arith.constant 0 : i32
    %0 = arith.cmpi eq, %arg1, %c0_i32 : i32
    %1 = arith.extui %0 : i1 to i32
    %c0_i32_0 = arith.constant 0 : i32
    %2 = arith.cmpi ne, %1, %c0_i32_0 : i32
    scf.if %2 {
      %c0_16 = arith.constant 0 : index
      %c0_17 = arith.constant 0 : index
      %45 = vector.load %arg2[%c0_16, %c0_17] : memref<16x128xf32, #tpu.memory_space<vmem>>, vector<16x128xf32>
      %c0_18 = arith.constant 0 : index
      %c0_19 = arith.constant 0 : index
      %46 = vector.load %arg3[%c0_18, %c0_19] : memref<128x128xbf16, #tpu.memory_space<vmem>>, vector<128x128xbf16>
      %47 = arith.truncf %45 : vector<16x128xf32> to vector<16x128xbf16>
      %cst_20 = arith.constant dense<0.000000e+00> : vector<16x128xf32>
      %48 = tpu.matmul %47, %46, %cst_20 {dimension_numbers = #tpu.dot_dimension_numbers<[1], [0], [0], [1], [0, 0, 1, 1], [], []>} : vector<16x128xbf16>, vector<128x128xbf16>, vector<16x128xf32> -> vector<16x128xf32>
      %c0_21 = arith.constant 0 : index
      %c0_22 = arith.constant 0 : index
      %49 = vector.load %arg4[%c0_21, %c0_22] : memref<1x128xf32, #tpu.memory_space<vmem>>, vector<1x128xf32>
      %50 = vector.broadcast %49 : vector<1x128xf32> to vector<16x128xf32>
      %51 = arith.addf %48, %50 : vector<16x128xf32>
      %c0_23 = arith.constant 0 : index
      %c0_24 = arith.constant 0 : index
      %52 = vector.load %arg12[%c0_23, %c0_24] : memref<16x128xf32, #tpu.memory_space<vmem>>, vector<16x128xf32>
      tpu.vector_store %arg12[%c0_23, %c0_24], %51 {strides = array<i32>} : memref<16x128xf32, #tpu.memory_space<vmem>>, vector<16x128xf32>,
    } else {
    }
    %3 = arith.index_cast %arg1 : i32 to index
    %c0 = arith.constant 0 : index
    %c0_1 = arith.constant 0 : index
    %4 = vector.load %arg5[%3, %c0, %c0_1] : memref<2x128x128xbf16, #tpu.memory_space<vmem>>, vector<1x128x128xbf16>
    %5 = vector.shape_cast %4 : vector<1x128x128xbf16> to vector<128x128xbf16>
    %c0_2 = arith.constant 0 : index
    %c0_3 = arith.constant 0 : index
    %c0_4 = arith.constant 0 : index
    %6 = vector.load %arg6[%c0_2, %c0_3, %c0_4] : memref<1x3x128xf32, #tpu.memory_space<vmem>>, vector<1x3x128xf32>
    %7 = vector.shape_cast %6 : vector<1x3x128xf32> to vector<3x128xf32>
    %8 = vector.extract_strided_slice %7 {offsets = [0, 0], sizes = [1, 128], strides = [1, 1]} : vector<3x128xf32> to vector<1x128xf32>
    %c0_5 = arith.constant 0 : index
    %c0_6 = arith.constant 0 : index
    %9 = vector.load %arg12[%c0_5, %c0_6] : memref<16x128xf32, #tpu.memory_space<vmem>>, vector<16x128xf32>
    %10 = vector.extract_strided_slice %7 {offsets = [1, 0], sizes = [1, 128], strides = [1, 1]} : vector<3x128xf32> to vector<1x128xf32>
    %11 = vector.extract_strided_slice %7 {offsets = [2, 0], sizes = [1, 128], strides = [1, 1]} : vector<3x128xf32> to vector<1x128xf32>
    %cst = arith.constant dense<0.000000e+00> : vector<16xf32>
    %12 = vector.multi_reduction <add>, %9, %cst [1] : vector<16x128xf32> to vector<16xf32>
    %13 = vector.shape_cast %12 : vector<16xf32> to vector<16x1xf32>
    %cst_7 = arith.constant 3.125000e-02 : f32
    %14 = vector.broadcast %cst_7 : f32 to vector<16x1xf32>
    %15 = arith.mulf %13, %14 : vector<16x1xf32>
    %16 = arith.mulf %9, %9 : vector<16x128xf32>
    %cst_8 = arith.constant dense<0.000000e+00> : vector<16xf32>
    %17 = vector.multi_reduction <add>, %16, %cst_8 [1] : vector<16x128xf32> to vector<16xf32>
    %18 = vector.shape_cast %17 : vector<16xf32> to vector<16x1xf32>
    %cst_9 = arith.constant 3.125000e-02 : f32
    %19 = vector.broadcast %cst_9 : f32 to vector<16x1xf32>
    %20 = arith.mulf %18, %19 : vector<16x1xf32>
    %21 = arith.mulf %15, %15 : vector<16x1xf32>
    %22 = arith.subf %20, %21 : vector<16x1xf32>
    %23 = vector.broadcast %15 : vector<16x1xf32> to vector<16x128xf32>
    %24 = arith.subf %9, %23 : vector<16x128xf32>
    %cst_10 = arith.constant 9.99999974E-6 : f32
    %25 = vector.broadcast %cst_10 : f32 to vector<16x1xf32>
    %26 = arith.addf %22, %25 : vector<16x1xf32>
    %27 = math.rsqrt %26 : vector<16x1xf32>
    %28 = vector.broadcast %27 : vector<16x1xf32> to vector<16x128xf32>
    %29 = arith.mulf %24, %28 : vector<16x128xf32>
    %30 = vector.broadcast %10 : vector<1x128xf32> to vector<16x128xf32>
    %31 = arith.mulf %29, %30 : vector<16x128xf32>
    %32 = vector.broadcast %11 : vector<1x128xf32> to vector<16x128xf32>
    %33 = arith.addf %31, %32 : vector<16x128xf32>
    %cst_11 = arith.constant 0.000000e+00 : f32
    %34 = vector.broadcast %cst_11 : f32 to vector<16x128xf32>
    %35 = arith.maximumf %33, %34 : vector<16x128xf32>
    %36 = arith.truncf %35 : vector<16x128xf32> to vector<16x128xbf16>
    %cst_12 = arith.constant dense<0.000000e+00> : vector<16x128xf32>
    %37 = tpu.matmul %36, %5, %cst_12 {dimension_numbers = #tpu.dot_dimension_numbers<[1], [0], [0], [1], [0, 0, 1, 1], [], []>} : vector<16x128xbf16>, vector<128x128xbf16>, vector<16x128xf32> -> vector<16x128xf32>
    %38 = arith.addf %9, %37 : vector<16x128xf32>
    %39 = vector.broadcast %8 : vector<1x128xf32> to vector<16x128xf32>
    %40 = arith.addf %38, %39 : vector<16x128xf32>
    %c0_13 = arith.constant 0 : index
    %c0_14 = arith.constant 0 : index
    %41 = vector.load %arg12[%c0_13, %c0_14] : memref<16x128xf32, #tpu.memory_space<vmem>>, vector<16x128xf32>
    tpu.vector_store %arg12[%c0_13, %c0_14], %40 {strides = array<i32>} : memref<16x128xf32, #tpu.memory_space<vmem>>, vector<16x128xf32>,
    %c1_i32 = arith.constant 1 : i32
    %42 = arith.cmpi eq, %arg1, %c1_i32 : i32
    %43 = arith.extui %42 : i1 to i32
    %c0_i32_15 = arith.constant 0 : i32
    %44 = arith.cmpi ne, %43, %c0_i32_15 : i32
    scf.if %44 {
      %c0_16 = arith.constant 0 : index
      %c0_17 = arith.constant 0 : index
      %45 = vector.load %arg12[%c0_16, %c0_17] : memref<16x128xf32, #tpu.memory_space<vmem>>, vector<16x128xf32>
      %c0_18 = arith.constant 0 : index
      %c0_19 = arith.constant 0 : index
      %46 = vector.load %arg7[%c0_18, %c0_19] : memref<1x128xf32, #tpu.memory_space<vmem>>, vector<1x128xf32>
      %c0_20 = arith.constant 0 : index
      %c0_21 = arith.constant 0 : index
      %47 = vector.load %arg8[%c0_20, %c0_21] : memref<1x128xf32, #tpu.memory_space<vmem>>, vector<1x128xf32>
      %cst_22 = arith.constant dense<0.000000e+00> : vector<16xf32>
      %48 = vector.multi_reduction <add>, %45, %cst_22 [1] : vector<16x128xf32> to vector<16xf32>
      %49 = vector.shape_cast %48 : vector<16xf32> to vector<16x1xf32>
      %cst_23 = arith.constant 3.125000e-02 : f32
      %50 = vector.broadcast %cst_23 : f32 to vector<16x1xf32>
      %51 = arith.mulf %49, %50 : vector<16x1xf32>
      %52 = arith.mulf %45, %45 : vector<16x128xf32>
      %cst_24 = arith.constant dense<0.000000e+00> : vector<16xf32>
      %53 = vector.multi_reduction <add>, %52, %cst_24 [1] : vector<16x128xf32> to vector<16xf32>
      %54 = vector.shape_cast %53 : vector<16xf32> to vector<16x1xf32>
      %cst_25 = arith.constant 3.125000e-02 : f32
      %55 = vector.broadcast %cst_25 : f32 to vector<16x1xf32>
      %56 = arith.mulf %54, %55 : vector<16x1xf32>
      %57 = arith.mulf %51, %51 : vector<16x1xf32>
      %58 = arith.subf %56, %57 : vector<16x1xf32>
      %59 = vector.broadcast %51 : vector<16x1xf32> to vector<16x128xf32>
      %60 = arith.subf %45, %59 : vector<16x128xf32>
      %cst_26 = arith.constant 9.99999974E-6 : f32
      %61 = vector.broadcast %cst_26 : f32 to vector<16x1xf32>
      %62 = arith.addf %58, %61 : vector<16x1xf32>
      %63 = math.rsqrt %62 : vector<16x1xf32>
      %64 = vector.broadcast %63 : vector<16x1xf32> to vector<16x128xf32>
      %65 = arith.mulf %60, %64 : vector<16x128xf32>
      %66 = vector.broadcast %46 : vector<1x128xf32> to vector<16x128xf32>
      %67 = arith.mulf %65, %66 : vector<16x128xf32>
      %68 = vector.broadcast %47 : vector<1x128xf32> to vector<16x128xf32>
      %69 = arith.addf %67, %68 : vector<16x128xf32>
      %cst_27 = arith.constant 0.000000e+00 : f32
      %70 = vector.broadcast %cst_27 : f32 to vector<16x128xf32>
      %71 = arith.maximumf %69, %70 : vector<16x128xf32>
      %c0_28 = arith.constant 0 : index
      %c0_29 = arith.constant 0 : index
      %72 = vector.load %arg9[%c0_28, %c0_29] : memref<128x128xbf16, #tpu.memory_space<vmem>>, vector<128x128xbf16>
      %73 = arith.truncf %71 : vector<16x128xf32> to vector<16x128xbf16>
      %cst_30 = arith.constant dense<0.000000e+00> : vector<16x128xf32>
      %74 = tpu.matmul %73, %72, %cst_30 {dimension_numbers = #tpu.dot_dimension_numbers<[1], [0], [0], [1], [0, 0, 1, 1], [], []>} : vector<16x128xbf16>, vector<128x128xbf16>, vector<16x128xf32> -> vector<16x128xf32>
      %c0_31 = arith.constant 0 : index
      %c0_32 = arith.constant 0 : index
      %75 = vector.load %arg10[%c0_31, %c0_32] : memref<1x128xf32, #tpu.memory_space<vmem>>, vector<1x128xf32>
      %76 = vector.broadcast %75 : vector<1x128xf32> to vector<16x128xf32>
      %77 = arith.addf %74, %76 : vector<16x128xf32>
      %c0_33 = arith.constant 0 : index
      %c0_34 = arith.constant 0 : index
      %78 = vector.load %arg11[%c0_33, %c0_34] : memref<16x128xf32, #tpu.memory_space<vmem>>, vector<16x128xf32>
      tpu.vector_store %arg11[%c0_33, %c0_34], %77 {strides = array<i32>} : memref<16x128xf32, #tpu.memory_space<vmem>>, vector<16x128xf32>,
    } else {
    }
    return
  }
  func.func @transform_0(%arg0: i32, %arg1: i32) -> (i32, i32) {
    %c0_i32 = arith.constant 0 : i32
    %c0_i32_0 = arith.constant 0 : i32
    return %arg0, %c0_i32 : i32, i32
  }
  func.func @transform_1(%arg0: i32, %arg1: i32) -> (i32, i32) {
    %c0_i32 = arith.constant 0 : i32
    %c0_i32_0 = arith.constant 0 : i32
    %c0_i32_1 = arith.constant 0 : i32
    return %c0_i32, %c0_i32_0 : i32, i32
  }
  func.func @transform_2(%arg0: i32, %arg1: i32) -> (i32, i32) {
    %c0_i32 = arith.constant 0 : i32
    %c0_i32_0 = arith.constant 0 : i32
    %c0_i32_1 = arith.constant 0 : i32
    return %c0_i32, %c0_i32_0 : i32, i32
  }
  func.func @transform_3(%arg0: i32, %arg1: i32) -> (i32, i32, i32) {
    %c0_i32 = arith.constant 0 : i32
    %c0_i32_0 = arith.constant 0 : i32
    %c0_i32_1 = arith.constant 0 : i32
    %c0_i32_2 = arith.constant 0 : i32
    return %c0_i32, %c0_i32_0, %c0_i32_1 : i32, i32, i32
  }
  func.func @transform_4(%arg0: i32, %arg1: i32) -> (i32, i32, i32) {
    %c0_i32 = arith.constant 0 : i32
    %c0_i32_0 = arith.constant 0 : i32
    %c0_i32_1 = arith.constant 0 : i32
    return %arg1, %c0_i32, %c0_i32_0 : i32, i32, i32
  }
  func.func @transform_5(%arg0: i32, %arg1: i32) -> (i32, i32) {
    %c0_i32 = arith.constant 0 : i32
    %c0_i32_0 = arith.constant 0 : i32
    %c0_i32_1 = arith.constant 0 : i32
    return %c0_i32, %c0_i32_0 : i32, i32
  }
  func.func @transform_6(%arg0: i32, %arg1: i32) -> (i32, i32) {
    %c0_i32 = arith.constant 0 : i32
    %c0_i32_0 = arith.constant 0 : i32
    %c0_i32_1 = arith.constant 0 : i32
    return %c0_i32, %c0_i32_0 : i32, i32
  }
  func.func @transform_7(%arg0: i32, %arg1: i32) -> (i32, i32) {
    %c0_i32 = arith.constant 0 : i32
    %c0_i32_0 = arith.constant 0 : i32
    %c0_i32_1 = arith.constant 0 : i32
    return %c0_i32, %c0_i32_0 : i32, i32
  }
  func.func @transform_8(%arg0: i32, %arg1: i32) -> (i32, i32) {
    %c0_i32 = arith.constant 0 : i32
    %c0_i32_0 = arith.constant 0 : i32
    %c0_i32_1 = arith.constant 0 : i32
    return %c0_i32, %c0_i32_0 : i32, i32
  }
  func.func @transform_9(%arg0: i32, %arg1: i32) -> (i32, i32) {
    %c0_i32 = arith.constant 0 : i32
    %c0_i32_0 = arith.constant 0 : i32
    return %arg0, %c0_i32 : i32, i32
  }
}

</mosaic_0001>

<llo_original>
// kernel: tpu_custom_call.1
$region0: #{tpu_custom_call.1}
  #allocation0 [shape = 'u32[]', space=smem, size = 0x4, offset = 0x4, fixed_abs, tag = 'smem constant byte address 0x4 - core index']
  #allocation1 [shape = 'u32[144,128]{1,0:T(1,128)}', space=vmem, size = 0x12000, scoped, tag = 'internal scratch']
  #allocation2 [shape = 'f32[16,128]{1,0:T(8,128)}', space=vmem, size = 0x2000, scoped, tag = 'scratch operand']
  %s0 = inlined_call_operand.hbm [shape: f32[16,128], index: 0, kind: input, shape index: {}]
  %s1 = inlined_call_operand.hbm [shape: bf16[128,128], index: 1, kind: input, shape index: {}]
  %s2 = inlined_call_operand.vmem [shape: f32[1,128], index: 2, kind: input, shape index: {}]
  %s3 = inlined_call_operand.hbm [shape: bf16[2,128,128], index: 3, kind: input, shape index: {}]
  %s4 = inlined_call_operand.vmem [shape: f32[2,3,128], index: 4, kind: input, shape index: {}]
  %s5 = inlined_call_operand.vmem [shape: f32[1,128], index: 5, kind: input, shape index: {}]
  %s6 = inlined_call_operand.vmem [shape: f32[1,128], index: 6, kind: input, shape index: {}]
  %s7 = inlined_call_operand.hbm [shape: bf16[128,128], index: 7, kind: input, shape index: {}]
  %s8 = inlined_call_operand.vmem [shape: f32[1,128], index: 8, kind: input, shape index: {}]
  %s9 = inlined_call_operand.hbm [shape: f32[16,128], index: 9, kind: output, shape index: {}]
  %s10 = sld [smem:[#allocation0]]
  $region93: #{tpu_custom_call.1} parent=0
    _
  %s12 = ssub.s32 1, %s10
  %s13 = scalar_select 0, %s12, %s10
  $region1: #{tpu_custom_call.1} parent=0
    #allocation3 [shape = 'u8[8192]{0}', space=vmem, size = 0x2000, scoped, tag = 'input window, operand 0, single buffered']
    #allocation4 [shape = 's32[2]{0}', space=sflag, size = 0x8, scoped, tag = 'scoped memory for tpu_custom_call.1']
    #allocation5 [shape = 's32[2]{0}', space=sflag, size = 0x8, scoped, tag = 'scoped memory for tpu_custom_call.1']
    #allocation6 [shape = 'u8[32768]{0}', space=vmem, size = 0x8000, scoped, tag = 'input window, operand 1, single buffered']
    #allocation7 [shape = 's32[1]{0}', space=sflag, size = 0x4, scoped, tag = 'scoped memory for tpu_custom_call.1']
    #allocation8 [shape = 'u8[65536]{0}', space=vmem, size = 0x10000, scoped, tag = 'input window, operand 3, single buffered']
    #allocation9 [shape = 'u8[32768]{0}', space=vmem, size = 0x8000, scoped, tag = 'input window, operand 7, single buffered']
    #allocation10 [shape = 's32[1]{0}', space=sflag, size = 0x4, scoped, tag = 'scoped memory for tpu_custom_call.1']
    #allocation11 [shape = 'u8[8192]{0}', space=vmem, size = 0x2000, scoped, tag = 'output window, operand 0, single buffered']
    %14 = vsyncpa [#allocation4], 0
    %15 = vsyncpa [#allocation7], 0
    %16 = vsyncpa [#allocation10], 0
    %17 = vsyncpa [#allocation5], 0
    loop: start=0, step=1, limit=4
    $region2: #{tpu_custom_call.1} parent=1 // loop_pre_header
      _
    $region3: #{tpu_custom_call.1} parent=1 // loop_header
      %s19 = sphi 0, %s23
      %p20 = scmp.ge.s32.totalorder %s19, 4
      %s26 = sphi 0, %s38
      %s27 = sphi 0, %s34
      %s28 = sphi 0, %s26
      %s29 = sphi 0, %s27
      %s30 = sphi 0, %s28
      %s31 = sphi 0, %s29
      %s41 = sphi 0, %s43
      %s44 = sphi 0, %s41
      %s45 = sphi 0, %s44
      %s61 = sphi 0, %s45
      %s65 = sphi 0, %s65
      %s67 = sphi 0, %s65
      %s68 = sphi 0, %s67
      %s82 = sphi 0, %s68
      %s86 = sphi 0, %s86
      %s88 = sphi 0, %s86
      %s89 = sphi 0, %s88
      %s103 = sphi 0, %s89
      %s107 = sphi 0, %s107
      %s109 = sphi 0, %s107
      %s110 = sphi 0, %s109
      %s124 = sphi 0, %s110
      %s130 = sphi 0, %s132
      %s133 = sphi 0, %s130
      %s134 = sphi 0, %s133
      %s150 = sphi 0, %s134
      %s154 = sphi 0, %s154
      %s156 = sphi 0, %s154
      %s157 = sphi 0, %s156
      %s171 = sphi 0, %s157
      %s175 = sphi 0, %s175
      %s177 = sphi 0, %s175
      %s178 = sphi 0, %s177
      %s192 = sphi 0, %s178
      %s196 = sphi 0, %s196
      %s198 = sphi 0, %s196
      %s199 = sphi 0, %s198
      %s213 = sphi 0, %s199
      %s217 = sphi 0, %s217
      %s219 = sphi 0, %s217
      %s220 = sphi 0, %s219
      %s234 = sphi 0, %s220
      %s240 = sphi 0, %s242
      %s243 = sphi 0, %s240
      %s244 = sphi 0, %s243
      %s260 = sphi 0, %s244
    $region4: #{tpu_custom_call.1} parent=1 // loop_header_branch
      %22 = sbr.rel (%p20) target = $region8
    $region5: #{tpu_custom_call.1} parent=1 // loop_body
      %s24 = ssub.s32 %s19, 1
      %s25 = ssub.s32 %s19, 2
      %s32 = sadd.s32 1, %s27
      %p33 = scmp.ge.s32.totalorder %s32, 2
      %s34 = scalar_select %p33, 0, %s32
      %s35 = sadd.s32 1, %s26
      %s36 = scalar_select %p33, %s35, %s26
      %p37 = scmp.ge.s32.totalorder %s36, 1
      %s38 = scalar_select %p37, 0, %s36
      %s39 = ssub.s32 %s26, %s38
      %p40 = scmp.eq.s32.totalorder %s39, 0
      %s42 = sadd.s32 %s41, 1
      %s43 = scalar_select %p40, %s41, %s42
      %p46 = pneg %p40
      %p47 = scmp.eq.s32.totalorder %s19, 1
      %p48 = por %p46, %p47
      %p49 = scmp.ne.s32.totalorder %s41, %s44
      %p50 = scmp.eq.s32.totalorder %s19, 0
      %p51 = por %p49, %p50
      %p52 = scmp.ne.s32.totalorder %s41, %s44
      %p53 = scmp.eq.s32.totalorder %s24, 1
      %p54 = por %p52, %p53
      %p55 = scmp.ne.s32.totalorder %s44, %s45
      %p56 = scmp.eq.s32.totalorder %s24, 0
      %p57 = por %p55, %p56
      %p58 = scmp.ne.s32.totalorder %s44, %s45
      %p59 = scmp.eq.s32.totalorder %s25, 1
      %p60 = por %p58, %p59
      %p62 = scmp.ne.s32.totalorder %s45, %s61
      %p63 = scmp.eq.s32.totalorder %s25, 0
      %p64 = por %p62, %p63
      %s66 = sadd.s32 %s65, 1
      %p69 = scmp.eq.s32.totalorder %s19, 1
      %p70 = scmp.ne.s32.totalorder %s65, %s67
      %p71 = scmp.eq.s32.totalorder %s19, 0
      %p72 = por %p70, %p71
      %p73 = scmp.ne.s32.totalorder %s65, %s67
      %p74 = scmp.eq.s32.totalorder %s24, 1
      %p75 = por %p73, %p74
      %p76 = scmp.ne.s32.totalorder %s67, %s68
      %p77 = scmp.eq.s32.totalorder %s24, 0
      %p78 = por %p76, %p77
      %p79 = scmp.ne.s32.totalorder %s67, %s68
      %p80 = scmp.eq.s32.totalorder %s25, 1
      %p81 = por %p79, %p80
      %p83 = scmp.ne.s32.totalorder %s68, %s82
      %p84 = scmp.eq.s32.totalorder %s25, 0
      %p85 = por %p83, %p84
      %s87 = sadd.s32 %s86, 1
      %p90 = scmp.eq.s32.totalorder %s19, 1
      %p91 = scmp.ne.s32.totalorder %s86, %s88
      %p92 = scmp.eq.s32.totalorder %s19, 0
      %p93 = por %p91, %p92
      %p94 = scmp.ne.s32.totalorder %s86, %s88
      %p95 = scmp.eq.s32.totalorder %s24, 1
      %p96 = por %p94, %p95
      %p97 = scmp.ne.s32.totalorder %s88, %s89
      %p98 = scmp.eq.s32.totalorder %s24, 0
      %p99 = por %p97, %p98
      %p100 = scmp.ne.s32.totalorder %s88, %s89
      %p101 = scmp.eq.s32.totalorder %s25, 1
      %p102 = por %p100, %p101
      %p104 = scmp.ne.s32.totalorder %s89, %s103
      %p105 = scmp.eq.s32.totalorder %s25, 0
      %p106 = por %p104, %p105
      %s108 = sadd.s32 %s107, 1
      %p111 = scmp.eq.s32.totalorder %s19, 1
      %p112 = scmp.ne.s32.totalorder %s107, %s109
      %p113 = scmp.eq.s32.totalorder %s19, 0
      %p114 = por %p112, %p113
      %p115 = scmp.ne.s32.totalorder %s107, %s109
      %p116 = scmp.eq.s32.totalorder %s24, 1
      %p117 = por %p115, %p116
      %p118 = scmp.ne.s32.totalorder %s109, %s110
      %p119 = scmp.eq.s32.totalorder %s24, 0
      %p120 = por %p118, %p119
      %p121 = scmp.ne.s32.totalorder %s109, %s110
      %p122 = scmp.eq.s32.totalorder %s25, 1
      %p123 = por %p121, %p122
      %p125 = scmp.ne.s32.totalorder %s110, %s124
      %p126 = scmp.eq.s32.totalorder %s25, 0
      %p127 = por %p125, %p126
      %s128 = ssub.s32 %s27, %s34
      %p129 = scmp.eq.s32.totalorder %s128, 0
      %s131 = sadd.s32 %s130, 1
      %s132 = scalar_select %p129, %s130, %s131
      %p135 = pneg %p129
      %p136 = scmp.eq.s32.totalorder %s19, 1
      %p137 = por %p135, %p136
      %p138 = scmp.ne.s32.totalorder %s130, %s133
      %p139 = scmp.eq.s32.totalorder %s19, 0
      %p140 = por %p138, %p139
      %p141 = scmp.ne.s32.totalorder %s130, %s133
      %p142 = scmp.eq.s32.totalorder %s24, 1
      %p143 = por %p141, %p142
      %p144 = scmp.ne.s32.totalorder %s133, %s134
      %p145 = scmp.eq.s32.totalorder %s24, 0
      %p146 = por %p144, %p145
      %p147 = scmp.ne.s32.totalorder %s133, %s134
      %p148 = scmp.eq.s32.totalorder %s25, 1
      %p149 = por %p147, %p148
      %p151 = scmp.ne.s32.totalorder %s134, %s150
      %p152 = scmp.eq.s32.totalorder %s25, 0
      %p153 = por %p151, %p152
      %s155 = sadd.s32 %s154, 1
      %p158 = scmp.eq.s32.totalorder %s19, 1
      %p159 = scmp.ne.s32.totalorder %s154, %s156
      %p160 = scmp.eq.s32.totalorder %s19, 0
      %p161 = por %p159, %p160
      %p162 = scmp.ne.s32.totalorder %s154, %s156
      %p163 = scmp.eq.s32.totalorder %s24, 1
      %p164 = por %p162, %p163
      %p165 = scmp.ne.s32.totalorder %s156, %s157
      %p166 = scmp.eq.s32.totalorder %s24, 0
      %p167 = por %p165, %p166
      %p168 = scmp.ne.s32.totalorder %s156, %s157
      %p169 = scmp.eq.s32.totalorder %s25, 1
      %p170 = por %p168, %p169
      %p172 = scmp.ne.s32.totalorder %s157, %s171
      %p173 = scmp.eq.s32.totalorder %s25, 0
      %p174 = por %p172, %p173
      %s176 = sadd.s32 %s175, 1
      %p179 = scmp.eq.s32.totalorder %s19, 1
      %p180 = scmp.ne.s32.totalorder %s175, %s177
      %p181 = scmp.eq.s32.totalorder %s19, 0
      %p182 = por %p180, %p181
      %p183 = scmp.ne.s32.totalorder %s175, %s177
      %p184 = scmp.eq.s32.totalorder %s24, 1
      %p185 = por %p183, %p184
      %p186 = scmp.ne.s32.totalorder %s177, %s178
      %p187 = scmp.eq.s32.totalorder %s24, 0
      %p188 = por %p186, %p187
      %p189 = scmp.ne.s32.totalorder %s177, %s178
      %p190 = scmp.eq.s32.totalorder %s25, 1
      %p191 = por %p189, %p190
      %p193 = scmp.ne.s32.totalorder %s178, %s192
      %p194 = scmp.eq.s32.totalorder %s25, 0
      %p195 = por %p193, %p194
      %s197 = sadd.s32 %s196, 1
      %p200 = scmp.eq.s32.totalorder %s19, 1
      %p201 = scmp.ne.s32.totalorder %s196, %s198
      %p202 = scmp.eq.s32.totalorder %s19, 0
      %p203 = por %p201, %p202
      %p204 = scmp.ne.s32.totalorder %s196, %s198
      %p205 = scmp.eq.s32.totalorder %s24, 1
      %p206 = por %p204, %p205
      %p207 = scmp.ne.s32.totalorder %s198, %s199
      %p208 = scmp.eq.s32.totalorder %s24, 0
      %p209 = por %p207, %p208
      %p210 = scmp.ne.s32.totalorder %s198, %s199
      %p211 = scmp.eq.s32.totalorder %s25, 1
      %p212 = por %p210, %p211
      %p214 = scmp.ne.s32.totalorder %s199, %s213
      %p215 = scmp.eq.s32.totalorder %s25, 0
      %p216 = por %p214, %p215
      %s218 = sadd.s32 %s217, 1
      %p221 = scmp.eq.s32.totalorder %s19, 1
      %p222 = scmp.ne.s32.totalorder %s217, %s219
      %p223 = scmp.eq.s32.totalorder %s19, 0
      %p224 = por %p222, %p223
      %p225 = scmp.ne.s32.totalorder %s217, %s219
      %p226 = scmp.eq.s32.totalorder %s24, 1
      %p227 = por %p225, %p226
      %p228 = scmp.ne.s32.totalorder %s219, %s220
      %p229 = scmp.eq.s32.totalorder %s24, 0
      %p230 = por %p228, %p229
      %p231 = scmp.ne.s32.totalorder %s219, %s220
      %p232 = scmp.eq.s32.totalorder %s25, 1
      %p233 = por %p231, %p232
      %p235 = scmp.ne.s32.totalorder %s220, %s234
      %p236 = scmp.eq.s32.totalorder %s25, 0
      %p237 = por %p235, %p236
      %s238 = ssub.s32 %s26, %s38
      %p239 = scmp.eq.s32.totalorder %s238, 0
      %s241 = sadd.s32 %s240, 1
      %s242 = scalar_select %p239, %s240, %s241
      %p245 = pneg %p239
      %p246 = scmp.eq.s32.totalorder %s19, 1
      %p247 = por %p245, %p246
      %p248 = scmp.ne.s32.totalorder %s240, %s243
      %p249 = scmp.eq.s32.totalorder %s19, 0
      %p250 = por %p248, %p249
      %p251 = scmp.ne.s32.totalorder %s240, %s243
      %p252 = scmp.eq.s32.totalorder %s24, 1
      %p253 = por %p251, %p252
      %p254 = scmp.ne.s32.totalorder %s243, %s244
      %p255 = scmp.eq.s32.totalorder %s24, 0
      %p256 = por %p254, %p255
      %p257 = scmp.ne.s32.totalorder %s243, %s244
      %p258 = scmp.eq.s32.totalorder %s25, 1
      %p259 = por %p257, %p258
      %p261 = scmp.ne.s32.totalorder %s244, %s260
      %p262 = scmp.eq.s32.totalorder %s25, 0
      %p263 = por %p261, %p262
      %p264 = scmp.le.s32.totalorder 1, %s19
      %p265 = scmp.lt.s32.totalorder %s19, 3
      %p266 = pnand %p264, %p265
      %p267 = pneg %p266
      // Predicated region
      $region9: #{tpu_custom_call.1} parent=5 // pred_check
        _
      $region10: #{tpu_custom_call.1} parent=5 // pred_check_branch
        %269 = sbr.rel (%p266) target = $region12
      $region11: #{tpu_custom_call.1} parent=5 // pred_region
        %s270 = ssub.s32 %s19, 1
        // Predicated region
        $region13: #{tpu_custom_call.1} parent=11 // pred_check
          %p271 = pneg %p57
        $region14: #{tpu_custom_call.1} parent=11 // pred_check_branch
          %273 = sbr.rel (%p271) target = $region16
        $region15: #{tpu_custom_call.1} parent=11 // pred_region
          %s274 = smul.u32 2, %s28
          %s276 = ssub.s32 256, 256
          %277 = vsyncadd [#allocation4], %s276
          %s278 = smul.addr %s274, 128
          %s279 = scalar_lea.hbm %s0, %s278
          %s280 = sshll.u32 [#allocation3], 4
          %s281 = int_to_ptr.vmem [resolvable:$true] %s280
          %286 = dma.hbm_to_vmem [thread:$0]  %s279, 256, %s281, [#allocation4], 128, 128, 8
        $region16: #{tpu_custom_call.1} parent=11 // pred_fallthru
          _
        // Predicated region
        $region17: #{tpu_custom_call.1} parent=11 // pred_check
          %p287 = pneg %p78
        $region18: #{tpu_custom_call.1} parent=11 // pred_check_branch
          %289 = sbr.rel (%p287) target = $region20
        $region19: #{tpu_custom_call.1} parent=11 // pred_region
          %s291 = ssub.s32 1024, 1024
          %292 = vsyncadd [#allocation7], %s291
          %s293 = sshll.u32 [#allocation6], 4
          %s294 = int_to_ptr.vmem [resolvable:$true] %s293
          %299 = dma.hbm_to_vmem [thread:$0]  %s1, 1024, %s294, [#allocation7], 64, 64, 4
        $region20: #{tpu_custom_call.1} parent=11 // pred_fallthru
          _
        // Predicated region
        $region21: #{tpu_custom_call.1} parent=11 // pred_check
          %p300 = pneg %p99
        $region22: #{tpu_custom_call.1} parent=11 // pred_check_branch
          %302 = sbr.rel (%p300) target = $region24
        $region23: #{tpu_custom_call.1} parent=11 // pred_region
          _
        $region24: #{tpu_custom_call.1} parent=11 // pred_fallthru
          _
        // Predicated region
        $region25: #{tpu_custom_call.1} parent=11 // pred_check
          %p303 = pneg %p120
        $region26: #{tpu_custom_call.1} parent=11 // pred_check_branch
          %305 = sbr.rel (%p303) target = $region28
        $region27: #{tpu_custom_call.1} parent=11 // pred_region
          %s307 = ssub.s32 2048, 2048
          %308 = vsyncadd [#allocation7], %s307
          %s309 = sshll.u32 [#allocation8], 4
          %s310 = int_to_ptr.vmem [resolvable:$true] %s309
          %315 = dma.hbm_to_vmem [thread:$0]  %s3, 2048, %s310, [#allocation7], 64, 64, 4
        $region28: #{tpu_custom_call.1} parent=11 // pred_fallthru
          _
        // Predicated region
        $region29: #{tpu_custom_call.1} parent=11 // pred_check
          %p316 = pneg %p167
        $region30: #{tpu_custom_call.1} parent=11 // pred_check_branch
          %318 = sbr.rel (%p316) target = $region32
        $region31: #{tpu_custom_call.1} parent=11 // pred_region
          _
        $region32: #{tpu_custom_call.1} parent=11 // pred_fallthru
          _
        // Predicated region
        $region33: #{tpu_custom_call.1} parent=11 // pred_check
          %p319 = pneg %p188
        $region34: #{tpu_custom_call.1} parent=11 // pred_check_branch
          %321 = sbr.rel (%p319) target = $region36
        $region35: #{tpu_custom_call.1} parent=11 // pred_region
          _
        $region36: #{tpu_custom_call.1} parent=11 // pred_fallthru
          _
        // Predicated region
        $region37: #{tpu_custom_call.1} parent=11 // pred_check
          %p322 = pneg %p209
        $region38: #{tpu_custom_call.1} parent=11 // pred_check_branch
          %324 = sbr.rel (%p322) target = $region40
        $region39: #{tpu_custom_call.1} parent=11 // pred_region
          %s326 = ssub.s32 1024, 1024
          %327 = vsyncadd [#allocation10], %s326
          %s328 = sshll.u32 [#allocation9], 4
          %s329 = int_to_ptr.vmem [resolvable:$true] %s328
          %334 = dma.hbm_to_vmem [thread:$0]  %s7, 1024, %s329, [#allocation10], 64, 64, 4
        $region40: #{tpu_custom_call.1} parent=11 // pred_fallthru
          _
        // Predicated region
        $region41: #{tpu_custom_call.1} parent=11 // pred_check
          %p335 = pneg %p230
        $region42: #{tpu_custom_call.1} parent=11 // pred_check_branch
          %337 = sbr.rel (%p335) target = $region44
        $region43: #{tpu_custom_call.1} parent=11 // pred_region
          _
        $region44: #{tpu_custom_call.1} parent=11 // pred_fallthru
          _
      $region12: #{tpu_custom_call.1} parent=5 // pred_fallthru
        _
      %p338 = scmp.lt.s32.totalorder %s19, 2
      // Predicated region
      $region45: #{tpu_custom_call.1} parent=5 // pred_check
        %p339 = pneg %p338
      $region46: #{tpu_custom_call.1} parent=5 // pred_check_branch
        %341 = sbr.rel (%p339) target = $region48
      $region47: #{tpu_custom_call.1} parent=5 // pred_region
        // Predicated region
        $region49: #{tpu_custom_call.1} parent=47 // pred_check
          %p342 = pneg %p140
        $region50: #{tpu_custom_call.1} parent=47 // pred_check_branch
          %344 = sbr.rel (%p342) target = $region52
        $region51: #{tpu_custom_call.1} parent=47 // pred_region
          %p345 = scmp.lt.s32.totalorder %s27, 1
          %s346 = scalar_select %p345, %s27, 1
          %s347 = smul.addr %s346, 4
          %s348 = scalar_lea.vmem %s4, %s347
        $region52: #{tpu_custom_call.1} parent=47 // pred_fallthru
          _
      $region48: #{tpu_custom_call.1} parent=5 // pred_fallthru
        _
      %p349 = scmp.le.s32.totalorder 1, %s19
      %p350 = scmp.lt.s32.totalorder %s19, 3
      %p351 = pnand %p349, %p350
      %p352 = pneg %p351
      // Predicated region
      $region53: #{tpu_custom_call.1} parent=5 // pred_check
        _
      $region54: #{tpu_custom_call.1} parent=5 // pred_check_branch
        %354 = sbr.rel (%p351) target = $region56
      $region55: #{tpu_custom_call.1} parent=5 // pred_region
        %s355 = ssub.s32 %s19, 1
        // Predicated region
        $region57: #{tpu_custom_call.1} parent=55 // pred_check
          %p356 = pneg %p57
        $region58: #{tpu_custom_call.1} parent=55 // pred_check_branch
          %358 = sbr.rel (%p356) target = $region60
        $region59: #{tpu_custom_call.1} parent=55 // pred_region
          %359 = dma.done [#allocation4], 256
        $region60: #{tpu_custom_call.1} parent=55 // pred_fallthru
          _
        // Predicated region
        $region61: #{tpu_custom_call.1} parent=55 // pred_check
          %p360 = pneg %p78
        $region62: #{tpu_custom_call.1} parent=55 // pred_check_branch
          %362 = sbr.rel (%p360) target = $region64
        $region63: #{tpu_custom_call.1} parent=55 // pred_region
          %363 = dma.done [#allocation7], 1024
        $region64: #{tpu_custom_call.1} parent=55 // pred_fallthru
          _
        // Predicated region
        $region65: #{tpu_custom_call.1} parent=55 // pred_check
          %p364 = pneg %p120
        $region66: #{tpu_custom_call.1} parent=55 // pred_check_branch
          %366 = sbr.rel (%p364) target = $region68
        $region67: #{tpu_custom_call.1} parent=55 // pred_region
          %367 = dma.done [#allocation7], 2048
        $region68: #{tpu_custom_call.1} parent=55 // pred_fallthru
          _
        // Predicated region
        $region69: #{tpu_custom_call.1} parent=55 // pred_check
          %p368 = pneg %p209
        $region70: #{tpu_custom_call.1} parent=55 // pred_check_branch
          %370 = sbr.rel (%p368) target = $region72
        $region71: #{tpu_custom_call.1} parent=55 // pred_region
          %371 = dma.done [#allocation10], 1024
        $region72: #{tpu_custom_call.1} parent=55 // pred_fallthru
          _
        %p372 = pneg %p57
        %p373 = pneg %p54
        %p374 = pneg %p78
        %p375 = pneg %p75
        %p376 = pneg %p99
        %p377 = pneg %p96
        %p378 = pneg %p120
        %p379 = pneg %p117
        %p380 = scmp.lt.s32.totalorder %s29, 1
        %s381 = scalar_select %p380, %s29, 1
        %s382 = smul.addr %s381, 4
        %s383 = scalar_lea.vmem %s4, %s382
        %p384 = pneg %p146
        %p385 = pneg %p143
        %p386 = pneg %p167
        %p387 = pneg %p164
        %p388 = pneg %p188
        %p389 = pneg %p185
        %p390 = pneg %p209
        %p391 = pneg %p206
        %p392 = pneg %p230
        %p393 = pneg %p227
        %p394 = pneg %p256
        %p395 = pneg %p253
        %s396 = smul.u32 2, %s28
        %p397 = scmp.lt.s32.totalorder %s29, 1
        %s398 = scalar_select %p397, %s29, 1
        %s399 = smul.addr %s398, 4
        %s400 = scalar_lea.vmem %s4, %s399
        %s401 = smul.u32 2, %s28
        %p403 = scmp.eq.s32.totalorder %s29, 0
        // Predicated region
        $region73: #{tpu_custom_call.1} parent=55 // pred_check
          %p404 = pneg %p403
        $region74: #{tpu_custom_call.1} parent=55 // pred_check_branch
          %406 = sbr.rel (%p404) target = $region76
        $region75: #{tpu_custom_call.1} parent=55 // pred_region
          %v407 = vld [vmem:[#allocation3] sm:$0xff]
          %v408 = vld [vmem:[#allocation3 + $0x8] sm:$0xff]
          %v409 = vld [vmem:[#allocation6] sm:$0xf]
          %v410 = vld [vmem:[#allocation6 + $0x4] sm:$0xf]
          %v411 = vld [vmem:[#allocation6 + $0x8] sm:$0xf]
          %v412 = vld [vmem:[#allocation6 + $0xc] sm:$0xf]
          %v413 = vld [vmem:[#allocation6 + $0x10] sm:$0xf]
          %v414 = vld [vmem:[#allocation6 + $0x14] sm:$0xf]
          %v415 = vld [vmem:[#allocation6 + $0x18] sm:$0xf]
          %v416 = vld [vmem:[#allocation6 + $0x1c] sm:$0xf]
          %v417 = vld [vmem:[#allocation6 + $0x20] sm:$0xf]
          %v418 = vld [vmem:[#allocation6 + $0x24] sm:$0xf]
          %v419 = vld [vmem:[#allocation6 + $0x28] sm:$0xf]
          %v420 = vld [vmem:[#allocation6 + $0x2c] sm:$0xf]
          %v421 = vld [vmem:[#allocation6 + $0x30] sm:$0xf]
          %v422 = vld [vmem:[#allocation6 + $0x34] sm:$0xf]
          %v423 = vld [vmem:[#allocation6 + $0x38] sm:$0xf]
          %v424 = vld [vmem:[#allocation6 + $0x3c] sm:$0xf]
          %v425 = vpack.c.bf16 %v408, %v407
          %v426 = vld [vmem:[%s2] sm:$0x1]
          %v428 = vlaneseq
          %v429 = vshrl.u32 %v428, 7
          %v430 = vsub.s32 0, %v429
          %v431 = vrot.slane %v426, %v430
          %v449 = vunpack.c.l.b16 %v409
          %v450 = vunpack.c.l.b16 %v410
          %v451 = vunpack.c.l.b16 %v411
          %v452 = vunpack.c.l.b16 %v412
          %v453 = vunpack.c.l.b16 %v413
          %v454 = vunpack.c.l.b16 %v414
          %v455 = vunpack.c.l.b16 %v415
          %v456 = vunpack.c.l.b16 %v416
          %v457 = vunpack.c.l.b16 %v417
          %v458 = vunpack.c.l.b16 %v418
          %v459 = vunpack.c.l.b16 %v419
          %v460 = vunpack.c.l.b16 %v420
          %v461 = vunpack.c.l.b16 %v421
          %v462 = vunpack.c.l.b16 %v422
          %v463 = vunpack.c.l.b16 %v423
          %v464 = vunpack.c.l.b16 %v424
          %v465 = vpack.c.b16 %v450, %v449
          %v466 = vpack.c.b16 %v452, %v451
          %v467 = vpack.c.b16 %v454, %v453
          %v468 = vpack.c.b16 %v456, %v455
          %v469 = vpack.c.b16 %v458, %v457
          %v470 = vpack.c.b16 %v460, %v459
          %v471 = vpack.c.b16 %v462, %v461
          %v472 = vpack.c.b16 %v464, %v463
          %481 = vmatprep.subr.bf16.mxu0 0
          %482 = vmatpush1.bf16.msra.mxu0 %v472
          %483 = vmatprep.subr.bf16.mxu0 0
          %484 = vmatpush1.bf16.msra.mxu0 %v471
          %485 = vmatprep.subr.bf16.mxu0 0
          %486 = vmatpush1.bf16.msra.mxu0 %v470
          %487 = vmatprep.subr.bf16.mxu0 0
          %488 = vmatpush1.bf16.msra.mxu0 %v469
          %489 = vmatprep.subr.bf16.mxu0 0
          %490 = vmatpush1.bf16.msra.mxu0 %v468
          %491 = vmatprep.subr.bf16.mxu0 0
          %492 = vmatpush1.bf16.msra.mxu0 %v467
          %493 = vmatprep.subr.bf16.mxu0 0
          %494 = vmatpush1.bf16.msra.mxu0 %v466
          %495 = vmatprep.subr.bf16.mxu0 0
          %496 = vmatpush1.bf16.msra.mxu0 %v465
          %497 = vmatprep.subr.bf16.mxu0 0
          %498 = vmatpush2.bf16.msra.mxu0 0
          %499 = vmatprep.subr.bf16.mxu0 0
          %500 = vmatpush2.bf16.msra.mxu0 0
          %501 = vmatprep.subr.bf16.mxu0 0
          %502 = vmatpush2.bf16.msra.mxu0 0
          %503 = vmatprep.subr.bf16.mxu0 0
          %504 = vmatpush2.bf16.msra.mxu0 0
          %505 = vmatprep.subr.bf16.mxu0 0
          %506 = vmatpush2.bf16.msra.mxu0 0
          %507 = vmatprep.subr.bf16.mxu0 0
          %508 = vmatpush2.bf16.msra.mxu0 0
          %509 = vmatprep.subr.bf16.mxu0 0
          %510 = vmatpush2.bf16.msra.mxu0 0
          %511 = vmatprep.subr.bf16.mxu0 0
          %512 = vmatpush2.bf16.msra.mxu0 0
          %513 = vmatprep.mubr.bf16.mxu0 0
          %514 = vmatmul.mubr.bf16.gmra.mxu0 %v425
          %v515 = vpop.f32.mrf.mxu0
          %v516 = vadd.f32 %v431, %v515
          %v517 = vpop.f32.mrf.mxu0
          %v518 = vpop.f32.mrf.mxu0
          %v519 = vadd.f32 %v431, %v518
          %v520 = vpop.f32.mrf.mxu0
          %521 = vdwg.mxu0
          %522 = vst [vmem:[#allocation2] sm:$0xff] %v516
          %523 = vst [vmem:[#allocation2 + $0x8] sm:$0xff] %v519
        $region76: #{tpu_custom_call.1} parent=55 // pred_fallthru
          _
        %s524 = smul.u32 %s29, 16
        %s525 = smul.addr %s524, 4
        %s526 = scalar_lea.vmem [#allocation8], %s525
        %v527 = vld [vmem:[%s526] sm:$0xf]
        %v528 = vld [vmem:[%s526 + $0x4] sm:$0xf]
        %v529 = vld [vmem:[%s526 + $0x8] sm:$0xf]
        %v530 = vld [vmem:[%s526 + $0xc] sm:$0xf]
        %v531 = vld [vmem:[%s526 + $0x10] sm:$0xf]
        %v532 = vld [vmem:[%s526 + $0x14] sm:$0xf]
        %v533 = vld [vmem:[%s526 + $0x18] sm:$0xf]
        %v534 = vld [vmem:[%s526 + $0x1c] sm:$0xf]
        %v535 = vld [vmem:[%s526 + $0x20] sm:$0xf]
        %v536 = vld [vmem:[%s526 + $0x24] sm:$0xf]
        %v537 = vld [vmem:[%s526 + $0x28] sm:$0xf]
        %v538 = vld [vmem:[%s526 + $0x2c] sm:$0xf]
        %v539 = vld [vmem:[%s526 + $0x30] sm:$0xf]
        %v540 = vld [vmem:[%s526 + $0x34] sm:$0xf]
        %v541 = vld [vmem:[%s526 + $0x38] sm:$0xf]
        %v542 = vld [vmem:[%s526 + $0x3c] sm:$0xf]
        %v543 = vld [vmem:[%s400] sm:$0x7]
        %v544 = vld [vmem:[#allocation2] sm:$0xff]
        %v545 = vld [vmem:[#allocation2 + $0x8] sm:$0xff]
        %546 = vadd.xlane.f32.xlu0 %v544
        %v547 = vpop.xlane.xlu0 %546
        %548 = vadd.xlane.f32.xlu0 %v545
        %v549 = vpop.xlane.xlu0 %548
        %v550 = vmul.f32 %v547, 0.03125
        %v551 = vmul.f32 %v549, 0.03125
        %v552 = vmul.f32 %v544, %v544
        %v553 = vmul.f32 %v545, %v545
        %554 = vadd.xlane.f32.xlu0 %v552
        %v555 = vpop.xlane.xlu0 %554
        %556 = vadd.xlane.f32.xlu0 %v553
        %v557 = vpop.xlane.xlu0 %556
        %v558 = vmul.f32 %v555, 0.03125
        %v559 = vmul.f32 %v557, 0.03125
        %v560 = vmul.f32 %v550, %v550
        %v561 = vmul.f32 %v551, %v551
        %v562 = vsub.f32 %v558, %v560
        %v563 = vsub.f32 %v559, %v561
        %v564 = vsub.f32 %v544, %v550
        %v565 = vsub.f32 %v545, %v551
        %v566 = vadd.f32 %v562, 1e-05
        %v567 = vadd.f32 %v563, 1e-05
        %v568 = vrsqrt.pop %v566
        %v569 = vrsqrt.pop %v567
        %v570 = vmul.f32 %v564, %v568
        %v571 = vmul.f32 %v565, %v569
        %v572 = vlaneseq
        %v573 = vshrl.u32 %v572, 7
        %v574 = vsub.s32 1, %v573
        %v575 = vrot.slane %v543, %v574
        %v576 = vmul.f32 %v570, %v575
        %v577 = vmul.f32 %v571, %v575
        %v578 = vlaneseq
        %v579 = vshrl.u32 %v578, 7
        %v580 = vsub.s32 2, %v579
        %v581 = vrot.slane %v543, %v580
        %v582 = vadd.f32 %v576, %v581
        %v583 = vadd.f32 %v577, %v581
        %v584 = vmax.f32 %v582, 0.0
        %v585 = vmax.f32 %v583, 0.0
        %v586 = vpack.c.bf16 %v585, %v584
        %v603 = vunpack.c.l.b16 %v527
        %v604 = vunpack.c.l.b16 %v528
        %v605 = vunpack.c.l.b16 %v529
        %v606 = vunpack.c.l.b16 %v530
        %v607 = vunpack.c.l.b16 %v531
        %v608 = vunpack.c.l.b16 %v532
        %v609 = vunpack.c.l.b16 %v533
        %v610 = vunpack.c.l.b16 %v534
        %v611 = vunpack.c.l.b16 %v535
        %v612 = vunpack.c.l.b16 %v536
        %v613 = vunpack.c.l.b16 %v537
        %v614 = vunpack.c.l.b16 %v538
        %v615 = vunpack.c.l.b16 %v539
        %v616 = vunpack.c.l.b16 %v540
        %v617 = vunpack.c.l.b16 %v541
        %v618 = vunpack.c.l.b16 %v542
        %v619 = vpack.c.b16 %v604, %v603
        %v620 = vpack.c.b16 %v606, %v605
        %v621 = vpack.c.b16 %v608, %v607
        %v622 = vpack.c.b16 %v610, %v609
        %v623 = vpack.c.b16 %v612, %v611
        %v624 = vpack.c.b16 %v614, %v613
        %v625 = vpack.c.b16 %v616, %v615
        %v626 = vpack.c.b16 %v618, %v617
        %635 = vmatprep.subr.bf16.mxu0 0
        %636 = vmatpush1.bf16.msra.mxu0 %v626
        %637 = vmatprep.subr.bf16.mxu0 0
        %638 = vmatpush1.bf16.msra.mxu0 %v625
        %639 = vmatprep.subr.bf16.mxu0 0
        %640 = vmatpush1.bf16.msra.mxu0 %v624
        %641 = vmatprep.subr.bf16.mxu0 0
        %642 = vmatpush1.bf16.msra.mxu0 %v623
        %643 = vmatprep.subr.bf16.mxu0 0
        %644 = vmatpush1.bf16.msra.mxu0 %v622
        %645 = vmatprep.subr.bf16.mxu0 0
        %646 = vmatpush1.bf16.msra.mxu0 %v621
        %647 = vmatprep.subr.bf16.mxu0 0
        %648 = vmatpush1.bf16.msra.mxu0 %v620
        %649 = vmatprep.subr.bf16.mxu0 0
        %650 = vmatpush1.bf16.msra.mxu0 %v619
        %651 = vmatprep.subr.bf16.mxu0 0
        %652 = vmatpush2.bf16.msra.mxu0 0
        %653 = vmatprep.subr.bf16.mxu0 0
        %654 = vmatpush2.bf16.msra.mxu0 0
        %655 = vmatprep.subr.bf16.mxu0 0
        %656 = vmatpush2.bf16.msra.mxu0 0
        %657 = vmatprep.subr.bf16.mxu0 0
        %658 = vmatpush2.bf16.msra.mxu0 0
        %659 = vmatprep.subr.bf16.mxu0 0
        %660 = vmatpush2.bf16.msra.mxu0 0
        %661 = vmatprep.subr.bf16.mxu0 0
        %662 = vmatpush2.bf16.msra.mxu0 0
        %663 = vmatprep.subr.bf16.mxu0 0
        %664 = vmatpush2.bf16.msra.mxu0 0
        %665 = vmatprep.subr.bf16.mxu0 0
        %666 = vmatpush2.bf16.msra.mxu0 0
        %667 = vmatprep.mubr.bf16.mxu0 0
        %668 = vmatmul.mubr.bf16.gmra.mxu0 %v586
        %v669 = vpop.f32.mrf.mxu0
        %v670 = vadd.f32 0.0, %v669
        %v671 = vpop.f32.mrf.mxu0
        %v672 = vpop.f32.mrf.mxu0
        %v673 = vadd.f32 0.0, %v672
        %v674 = vpop.f32.mrf.mxu0
        %675 = vdwg.mxu0
        %v676 = vadd.f32 %v544, %v670
        %v677 = vadd.f32 %v545, %v673
        %v678 = vlaneseq
        %v679 = vshrl.u32 %v678, 7
        %v680 = vsub.s32 0, %v679
        %v681 = vrot.slane %v543, %v680
        %v682 = vadd.f32 %v676, %v681
        %v683 = vadd.f32 %v677, %v681
        %684 = vst [vmem:[#allocation2] sm:$0xff] %v682
        %685 = vst [vmem:[#allocation2 + $0x8] sm:$0xff] %v683
        %p686 = scmp.eq.s32.totalorder %s29, 1
        // Predicated region
        $region77: #{tpu_custom_call.1} parent=55 // pred_check
          %p687 = pneg %p686
        $region78: #{tpu_custom_call.1} parent=55 // pred_check_branch
          %689 = sbr.rel (%p687) target = $region80
        $region79: #{tpu_custom_call.1} parent=55 // pred_region
          %v690 = vld [vmem:[#allocation2] sm:$0xff]
          %v691 = vld [vmem:[#allocation2 + $0x8] sm:$0xff]
          %v692 = vld [vmem:[%s5] sm:$0x1]
          %v693 = vld [vmem:[%s6] sm:$0x1]
          %694 = vadd.xlane.f32.xlu0 %v690
          %v695 = vpop.xlane.xlu0 %694
          %696 = vadd.xlane.f32.xlu0 %v691
          %v697 = vpop.xlane.xlu0 %696
          %v698 = vmul.f32 %v695, 0.03125
          %v699 = vmul.f32 %v697, 0.03125
          %v700 = vmul.f32 %v690, %v690
          %v701 = vmul.f32 %v691, %v691
          %702 = vadd.xlane.f32.xlu0 %v700
          %v703 = vpop.xlane.xlu0 %702
          %704 = vadd.xlane.f32.xlu0 %v701
          %v705 = vpop.xlane.xlu0 %704
          %v706 = vmul.f32 %v703, 0.03125
          %v707 = vmul.f32 %v705, 0.03125
          %v708 = vmul.f32 %v698, %v698
          %v709 = vmul.f32 %v699, %v699
          %v710 = vsub.f32 %v706, %v708
          %v711 = vsub.f32 %v707, %v709
          %v712 = vsub.f32 %v690, %v698
          %v713 = vsub.f32 %v691, %v699
          %v714 = vadd.f32 %v710, 1e-05
          %v715 = vadd.f32 %v711, 1e-05
          %v716 = vrsqrt.pop %v714
          %v717 = vrsqrt.pop %v715
          %v718 = vmul.f32 %v712, %v716
          %v719 = vmul.f32 %v713, %v717
          %v721 = vlaneseq
          %v722 = vshrl.u32 %v721, 7
          %v723 = vsub.s32 0, %v722
          %v724 = vrot.slane %v692, %v723
          %v726 = vmul.f32 %v718, %v724
          %v727 = vmul.f32 %v719, %v724
          %v729 = vlaneseq
          %v730 = vshrl.u32 %v729, 7
          %v731 = vsub.s32 0, %v730
          %v732 = vrot.slane %v693, %v731
          %v734 = vadd.f32 %v726, %v732
          %v735 = vadd.f32 %v727, %v732
          %v736 = vmax.f32 %v734, 0.0
          %v737 = vmax.f32 %v735, 0.0
          %v738 = vld [vmem:[#allocation9] sm:$0xf]
          %v739 = vld [vmem:[#allocation9 + $0x4] sm:$0xf]
          %v740 = vld [vmem:[#allocation9 + $0x8] sm:$0xf]
          %v741 = vld [vmem:[#allocation9 + $0xc] sm:$0xf]
          %v742 = vld [vmem:[#allocation9 + $0x10] sm:$0xf]
          %v743 = vld [vmem:[#allocation9 + $0x14] sm:$0xf]
          %v744 = vld [vmem:[#allocation9 + $0x18] sm:$0xf]
          %v745 = vld [vmem:[#allocation9 + $0x1c] sm:$0xf]
          %v746 = vld [vmem:[#allocation9 + $0x20] sm:$0xf]
          %v747 = vld [vmem:[#allocation9 + $0x24] sm:$0xf]
          %v748 = vld [vmem:[#allocation9 + $0x28] sm:$0xf]
          %v749 = vld [vmem:[#allocation9 + $0x2c] sm:$0xf]
          %v750 = vld [vmem:[#allocation9 + $0x30] sm:$0xf]
          %v751 = vld [vmem:[#allocation9 + $0x34] sm:$0xf]
          %v752 = vld [vmem:[#allocation9 + $0x38] sm:$0xf]
          %v753 = vld [vmem:[#allocation9 + $0x3c] sm:$0xf]
          %v754 = vpack.c.bf16 %v737, %v736
          %v755 = vld [vmem:[%s8] sm:$0x1]
          %v757 = vlaneseq
          %v758 = vshrl.u32 %v757, 7
          %v759 = vsub.s32 0, %v758
          %v760 = vrot.slane %v755, %v759
          %v778 = vunpack.c.l.b16 %v738
          %v779 = vunpack.c.l.b16 %v739
          %v780 = vunpack.c.l.b16 %v740
          %v781 = vunpack.c.l.b16 %v741
          %v782 = vunpack.c.l.b16 %v742
          %v783 = vunpack.c.l.b16 %v743
          %v784 = vunpack.c.l.b16 %v744
          %v785 = vunpack.c.l.b16 %v745
          %v786 = vunpack.c.l.b16 %v746
          %v787 = vunpack.c.l.b16 %v747
          %v788 = vunpack.c.l.b16 %v748
          %v789 = vunpack.c.l.b16 %v749
          %v790 = vunpack.c.l.b16 %v750
          %v791 = vunpack.c.l.b16 %v751
          %v792 = vunpack.c.l.b16 %v752
          %v793 = vunpack.c.l.b16 %v753
          %v794 = vpack.c.b16 %v779, %v778
          %v795 = vpack.c.b16 %v781, %v780
          %v796 = vpack.c.b16 %v783, %v782
          %v797 = vpack.c.b16 %v785, %v784
          %v798 = vpack.c.b16 %v787, %v786
          %v799 = vpack.c.b16 %v789, %v788
          %v800 = vpack.c.b16 %v791, %v790
          %v801 = vpack.c.b16 %v793, %v792
          %810 = vmatprep.subr.bf16.mxu0 0
          %811 = vmatpush1.bf16.msra.mxu0 %v801
          %812 = vmatprep.subr.bf16.mxu0 0
          %813 = vmatpush1.bf16.msra.mxu0 %v800
          %814 = vmatprep.subr.bf16.mxu0 0
          %815 = vmatpush1.bf16.msra.mxu0 %v799
          %816 = vmatprep.subr.bf16.mxu0 0
          %817 = vmatpush1.bf16.msra.mxu0 %v798
          %818 = vmatprep.subr.bf16.mxu0 0
          %819 = vmatpush1.bf16.msra.mxu0 %v797
          %820 = vmatprep.subr.bf16.mxu0 0
          %821 = vmatpush1.bf16.msra.mxu0 %v796
          %822 = vmatprep.subr.bf16.mxu0 0
          %823 = vmatpush1.bf16.msra.mxu0 %v795
          %824 = vmatprep.subr.bf16.mxu0 0
          %825 = vmatpush1.bf16.msra.mxu0 %v794
          %826 = vmatprep.subr.bf16.mxu0 0
          %827 = vmatpush2.bf16.msra.mxu0 0
          %828 = vmatprep.subr.bf16.mxu0 0
          %829 = vmatpush2.bf16.msra.mxu0 0
          %830 = vmatprep.subr.bf16.mxu0 0
          %831 = vmatpush2.bf16.msra.mxu0 0
          %832 = vmatprep.subr.bf16.mxu0 0
          %833 = vmatpush2.bf16.msra.mxu0 0
          %834 = vmatprep.subr.bf16.mxu0 0
          %835 = vmatpush2.bf16.msra.mxu0 0
          %836 = vmatprep.subr.bf16.mxu0 0
          %837 = vmatpush2.bf16.msra.mxu0 0
          %838 = vmatprep.subr.bf16.mxu0 0
          %839 = vmatpush2.bf16.msra.mxu0 0
          %840 = vmatprep.subr.bf16.mxu0 0
          %841 = vmatpush2.bf16.msra.mxu0 0
          %842 = vmatprep.mubr.bf16.mxu0 0
          %843 = vmatmul.mubr.bf16.gmra.mxu0 %v754
          %v844 = vpop.f32.mrf.mxu0
          %v845 = vadd.f32 %v760, %v844
          %v846 = vpop.f32.mrf.mxu0
          %v847 = vpop.f32.mrf.mxu0
          %v848 = vadd.f32 %v760, %v847
          %v849 = vpop.f32.mrf.mxu0
          %850 = vdwg.mxu0
          %851 = vst [vmem:[#allocation11] sm:$0xff] %v845
          %852 = vst [vmem:[#allocation11 + $0x8] sm:$0xff] %v848
        $region80: #{tpu_custom_call.1} parent=55 // pred_fallthru
          _
        // Predicated region
        $region81: #{tpu_custom_call.1} parent=55 // pred_check
          %p853 = pneg %p253
        $region82: #{tpu_custom_call.1} parent=55 // pred_check_branch
          %855 = sbr.rel (%p853) target = $region84
        $region83: #{tpu_custom_call.1} parent=55 // pred_region
          %s856 = smul.u32 2, %s28
          %s858 = ssub.s32 256, 256
          %859 = vsyncadd [#allocation5], %s858
          %s860 = smul.addr %s856, 128
          %s861 = scalar_lea.hbm %s9, %s860
          %s862 = sshll.u32 [#allocation11], 4
          %s863 = int_to_ptr.vmem [resolvable:$true] %s862
          %868 = dma.vmem_to_hbm [thread:$0]  %s863, 256, %s861, [#allocation5], 128, 128, 8
        $region84: #{tpu_custom_call.1} parent=55 // pred_fallthru
          _
        // Predicated region
        $region85: #{tpu_custom_call.1} parent=55 // pred_check
          %p869 = pneg %p253
        $region86: #{tpu_custom_call.1} parent=55 // pred_check_branch
          %871 = sbr.rel (%p869) target = $region88
        $region87: #{tpu_custom_call.1} parent=55 // pred_region
          %872 = dma.done [#allocation5], 256
        $region88: #{tpu_custom_call.1} parent=55 // pred_fallthru
          _
      $region56: #{tpu_custom_call.1} parent=5 // pred_fallthru
        _
      %p873 = scmp.le.s32.totalorder 2, %s19
      // Predicated region
      $region89: #{tpu_custom_call.1} parent=5 // pred_check
        %p874 = pneg %p873
      $region90: #{tpu_custom_call.1} parent=5 // pred_check_branch
        %876 = sbr.rel (%p874) target = $region92
      $region91: #{tpu_custom_call.1} parent=5 // pred_region
        %s877 = ssub.s32 %s19, 2
      $region92: #{tpu_custom_call.1} parent=5 // pred_fallthru
        _
    $region6: #{tpu_custom_call.1} parent=1 // loop_footer
      %s23 = sadd.s32 1, %s19
    $region7: #{tpu_custom_call.1} parent=1 // loop_footer_branch
      %18 = sbr.rel target = $region3
    $region8: #{tpu_custom_call.1} parent=1 // loop_exit
      _
    %878 = vsyncpa [#allocation4], 1
    %s879 = scalar_lea.sflag [#allocation4], 1
    %880 = vsyncpa %s879, 1
    %881 = vsyncpa [#allocation7], 1
    %882 = vsyncpa [#allocation10], 1
    %883 = vsyncpa [#allocation5], 1
    %s884 = scalar_lea.sflag [#allocation5], 1
    %885 = vsyncpa %s884, 1

</llo_original>
